<compile_context>
chip_gen: v6e
topology: v6e:2x2x1
jax: 0.10.0
libtpu: 0.0.40
codegen_flags: <defaults>
</compile_context>

<pallas_src>
import jax
import jax.numpy as jnp
from jax import lax
from jax.experimental import pallas as pl
from jax.experimental.pallas import tpu as pltpu

_SUB_B = 256   # rows processed per inner sub-step (bounds live intermediates)
_LANE = 128


def _round_up(n, m):
    return ((n + m - 1) // m) * m


def _tpu_params():
    """Returns (vmem_budget_bytes_per_TensorCore, tensorcores_per_chip)."""
    kind = ""
    try:
        kind = str(jax.devices()[0].device_kind).lower()
    except Exception:
        pass
    cap = 64 << 20   # conservative fallback: v7x per-TensorCore VMEM
    try:
        cap = int(pltpu.get_tpu_info().vmem_capacity_bytes)
    except Exception:
        pass
    n_tc = 1
    if "7" in kind:
        # v7x: 64 MiB per TC (capacity may be reported per-chip), 2 TCs/chip.
        cap = min(cap, 64 << 20)
        n_tc = 2
    elif "v4" in kind:
        n_tc = 2          # megacore
    return cap, n_tc


def _choose_tile_b(B, input_dim, h2p, hp, out_bytes, budget, n_tc):
    """Largest batch tile that fits VMEM (resident weights + 2x x/out buffers),
    capped so multi-TC parts get >= n_tc grid steps. None => weights don't fit."""
    weight_bytes = input_dim * h2p * 2 + h2p * hp * 2 + (h2p + hp) * 4
    sub_b = min(_SUB_B, max(_round_up(B, 8), 8))
    temp_bytes = sub_b * (input_dim * 2 + h2p * 6 + hp * 4)
    headroom = 4 << 20
    avail = (budget * 3) // 4 - weight_bytes - temp_bytes - headroom
    if avail <= 0:
        return None
    per_row = 2 * (input_dim * 4 + hp * out_bytes)   # double-buffered x + out
    tmax = avail // per_row
    if tmax < min(B, 8):
        return None
    if B <= tmax and (n_tc <= 1 or B < 2 * _SUB_B):
        return B                                     # whole batch, one resident tile
    # Leave at least n_tc grid steps so megacore sharding has work to split.
    target = pl.cdiv(B, max(n_tc, 1))
    tile = min(int(tmax), int(target))
    if tile >= _SUB_B:
        tile = (tile // _SUB_B) * _SUB_B
    else:
        tile = max((tile // 8) * 8, 8)
    return min(tile, B)


def _mlp_kernel(x_ref, w1_ref, b1_ref, w2_ref, b2_ref, o_ref):
    # Weights/biases are grid-resident (index_map -> (0, 0), Buffered(1)).
    w1 = w1_ref[...]             # (input_dim, H2p) bf16
    w2 = w2_ref[...]             # (H2p, Hp)        bf16
    b1 = b1_ref[...]             # (1, H2p)         f32
    b2 = b2_ref[...]             # (1, Hp)          f32

    tile_b = x_ref.shape[0]
    sub_b = min(_SUB_B, tile_b)
    n_full = tile_b // sub_b
    rem = tile_b - n_full * sub_b

    def step(xs):
        xb = xs.astype(jnp.bfloat16)                               # VPU cast, free under MXU slack
        h = jnp.dot(xb, w1, preferred_element_type=jnp.float32)    # MXU, f32 acc
        h = jnp.maximum(h + b1, 0.0)                               # bias+ReLU in f32
        # Dropout(0.3): eval-mode identity.
        y = jnp.dot(h.astype(jnp.bfloat16), w2,
                    preferred_element_type=jnp.float32)
        y = jnp.maximum(y + b2, 0.0)
        # Dropout(0.3): eval-mode identity.
        return y.astype(o_ref.dtype)

    if n_full == 1 and rem == 0:
        o_ref[...] = step(x_ref[...])
    else:
        if n_full > 0:
            def body(s, carry):
                r = pl.multiple_of(s * sub_b, sub_b)
                o_ref[pl.ds(r, sub_b), :] = step(x_ref[pl.ds(r, sub_b), :])
                return carry
            # Cap unroll to bound live f32 intermediates (v5e headroom).
            lax.fori_loop(0, n_full, body, 0, unroll=min(n_full, 4))
        if rem > 0:
            r0 = n_full * sub_b
            o_ref[pl.ds(r0, rem), :] = step(x_ref[pl.ds(r0, rem), :])


def prepare_params(w1, b1, w2, b2):
    """Pad/cast parameters once (hoisted out of the per-call forward path).
    w1: (input_dim, 2H); b1: (1,2H) or (2H,); w2: (2H, H); b2: (1,H) or (H,)."""
    input_dim, h2 = w1.shape
    hidden = w2.shape[1]
    h2p = _round_up(h2, _LANE)
    hp = _round_up(hidden, _LANE)
    w1p = jnp.zeros((input_dim, h2p), jnp.bfloat16).at[:, :h2].set(
        w1.astype(jnp.bfloat16))
    b1p = jnp.zeros((1, h2p), jnp.float32).at[:, :h2].set(
        jnp.reshape(b1, (1, h2)).astype(jnp.float32))
    w2p = jnp.zeros((h2p, hp), jnp.bfloat16).at[:h2, :hidden].set(
        w2.astype(jnp.bfloat16))
    b2p = jnp.zeros((1, hp), jnp.float32).at[:, :hidden].set(
        jnp.reshape(b2, (1, hidden)).astype(jnp.float32))
    return {"w1": w1p, "b1": b1p, "w2": w2p, "b2": b2p,
            "input_dim": input_dim, "hidden": hidden, "h2p": h2p, "hp": hp}


def _pallas_forward(x, params, tile_b, out_dtype, budget, single_buffer_weights):
    B, input_dim = x.shape
    h2p, hp = params["h2p"], params["hp"]
    out_bytes = jnp.dtype(out_dtype).itemsize
    sub_b = min(_SUB_B, tile_b)
    w_copies = 1 if single_buffer_weights else 2
    need = (w_copies * (input_dim * h2p * 2 + h2p * hp * 2 + (h2p + hp) * 4)
            + 2 * tile_b * (input_dim * 4 + hp * out_bytes)
            + sub_b * (input_dim * 2 + h2p * 6 + hp * 4))
    vmem_limit = int(min(max(need + (8 << 20), 32 << 20), budget))

    # Constant-index resident operands: single-buffer them (no pipelining gain).
    wkw = {"pipeline_mode": pl.Buffered(1)} if single_buffer_weights else {}

    return pl.pallas_call(
        _mlp_kernel,
        out_shape=jax.ShapeDtypeStruct((B, hp), out_dtype),
        grid=(pl.cdiv(B, tile_b),),
        in_specs=[
            pl.BlockSpec((tile_b, input_dim), lambda i: (i, 0)),        # x: batch-tiled
            pl.BlockSpec((input_dim, h2p), lambda i: (0, 0), **wkw),    # w1: resident
            pl.BlockSpec((1, h2p), lambda i: (0, 0), **wkw),            # b1: resident
            pl.BlockSpec((h2p, hp), lambda i: (0, 0), **wkw),           # w2: resident
            pl.BlockSpec((1, hp), lambda i: (0, 0), **wkw),             # b2: resident
        ],
        out_specs=pl.BlockSpec((tile_b, hp), lambda i: (i, 0)),
        compiler_params=pltpu.CompilerParams(
            dimension_semantics=("parallel",),     # megacore sharding on 2-TC parts
            vmem_limit_bytes=vmem_limit),
    )(x, params["w1"], params["b1"], params["w2"], params["b2"])


def feature_extractor_forward(x, params, *, out_dtype=jnp.float32,
                              keep_padded=False):
    """x: (B, input_dim) float32; params from prepare_params().
    Returns (B, hidden) in out_dtype (or (B, hp) if keep_padded)."""
    B, input_dim = x.shape
    assert input_dim == params["input_dim"]
    h2p, hp, hidden = params["h2p"], params["hp"], params["hidden"]
    out_bytes = jnp.dtype(out_dtype).itemsize

    budget, n_tc = _tpu_params()
    tile_b = _choose_tile_b(B, input_dim, h2p, hp, out_bytes, budget, n_tc)

    if tile_b is None:
        # TODO(synk): add an N/K-tiled Pallas path (pl.when-accumulated K axis)
        # for weights too large to stay VMEM-resident; plain XLA fallback here.
        h = jnp.maximum(
            jnp.dot(x.astype(jnp.bfloat16), params["w1"],
                    preferred_element_type=jnp.float32) + params["b1"], 0.0)
        out = jnp.maximum(
            jnp.dot(h.astype(jnp.bfloat16), params["w2"],
                    preferred_element_type=jnp.float32) + params["b2"], 0.0
        ).astype(out_dtype)
    else:
        try:
            out = _pallas_forward(x, params, tile_b, out_dtype, budget,
                                  single_buffer_weights=True)
        except Exception:
            # Runtime without pipeline_mode=Buffered(1) support: rebuild with
            # default double-buffering (VMEM limit resized accordingly).
            out = _pallas_forward(x, params, tile_b, out_dtype, budget,
                                  single_buffer_weights=False)

    return out if keep_padded else out[:, :hidden]


def init_params(key, input_dim, hidden_dim):
    """Deterministic init mirroring nn.Linear's U(-1/sqrt(fan_in), 1/sqrt(fan_in))."""
    k1, k2, k3, k4 = jax.random.split(key, 4)
    h2 = hidden_dim * 2
    bound1 = 1.0 / jnp.sqrt(jnp.float32(input_dim))
    bound2 = 1.0 / jnp.sqrt(jnp.float32(h2))
    w1 = jax.random.uniform(k1, (input_dim, h2), jnp.float32, -bound1, bound1)
    b1 = jax.random.uniform(k2, (1, h2), jnp.float32, -bound1, bound1)
    w2 = jax.random.uniform(k3, (h2, hidden_dim), jnp.float32, -bound2, bound2)
    b2 = jax.random.uniform(k4, (1, hidden_dim), jnp.float32, -bound2, bound2)
    return w1, b1, w2, b2


if __name__ == "__main__":
    batch = 2
    input_dim = 32
    hidden_dim = 16  # small, consistent with FeatureExtractor(input_dim, hidden_dim)

    key = jax.random.PRNGKey(0)
    kx, kp = jax.random.split(key)
    x = jax.random.normal(kx, (batch, input_dim), dtype=jnp.float32)
    w1, b1, w2, b2 = init_params(kp, input_dim, hidden_dim)

    params = prepare_params(w1, b1, w2, b2)   # padding/casting done once
    out = feature_extractor_forward(x, params)
    out = jax.block_until_ready(out)

    # Pure-JAX reference (eval-mode dropout == identity), mirroring the kernel's
    # bf16 operand rounding with f32 accumulation.
    xf = x.astype(jnp.bfloat16).astype(jnp.float32)
    w1f = w1.astype(jnp.bfloat16).astype(jnp.float32)
    w2f = w2.astype(jnp.bfloat16).astype(jnp.float32)
    b1f = jnp.reshape(b1, (1, -1)).astype(jnp.float32)
    b2f = jnp.reshape(b2, (1, -1)).astype(jnp.float32)
    h_ref = jnp.maximum(xf @ w1f + b1f, 0.0)
    ref = jnp.maximum(
        h_ref.astype(jnp.bfloat16).astype(jnp.float32) @ w2f + b2f, 0.0)

    assert out.shape == (batch, hidden_dim)
    assert jnp.allclose(out, ref, atol=1e-2, rtol=1e-2), (
        float(jnp.max(jnp.abs(out - ref))))

    print("KERNEL_OK")
</pallas_src>

<mosaic_0001>
module attributes {stable_mosaic.version = 11 : i64} {
  func.func @_mlp_kernel(%arg0: i32, %arg1: memref<2x32xf32, #tpu.memory_space<vmem>>, %arg2: memref<32x128xbf16, #tpu.memory_space<vmem>>, %arg3: memref<1x128xf32, #tpu.memory_space<vmem>>, %arg4: memref<128x128xbf16, #tpu.memory_space<vmem>>, %arg5: memref<1x128xf32, #tpu.memory_space<vmem>>, %arg6: memref<2x128xf32, #tpu.memory_space<vmem>>) attributes {dimension_semantics = [#tpu.dimension_semantics<parallel>], iteration_bounds = array<i64: 1>, scalar_prefetch = 0 : i64, scratch_operands = 0 : i64, tpu.core_type = #tpu.core_type<tc>, window_params = [{transform_indices = @transform_0, window_bounds = array<i64: 2, 32>}, {pipeline_mode = #tpu.pipeline_mode<synchronous>, transform_indices = @transform_1, window_bounds = array<i64: 32, 128>}, {pipeline_mode = #tpu.pipeline_mode<synchronous>, transform_indices = @transform_2, window_bounds = array<i64: 1, 128>}, {pipeline_mode = #tpu.pipeline_mode<synchronous>, transform_indices = @transform_3, window_bounds = array<i64: 128, 128>}, {pipeline_mode = #tpu.pipeline_mode<synchronous>, transform_indices = @transform_4, window_bounds = array<i64: 1, 128>}, {transform_indices = @transform_5, window_bounds = array<i64: 2, 128>}]} {
    %c0 = arith.constant 0 : index
    %c0_0 = arith.constant 0 : index
    %0 = vector.load %arg2[%c0, %c0_0] : memref<32x128xbf16, #tpu.memory_space<vmem>>, vector<32x128xbf16>
    %c0_1 = arith.constant 0 : index
    %c0_2 = arith.constant 0 : index
    %1 = vector.load %arg4[%c0_1, %c0_2] : memref<128x128xbf16, #tpu.memory_space<vmem>>, vector<128x128xbf16>
    %c0_3 = arith.constant 0 : index
    %c0_4 = arith.constant 0 : index
    %2 = vector.load %arg3[%c0_3, %c0_4] : memref<1x128xf32, #tpu.memory_space<vmem>>, vector<1x128xf32>
    %c0_5 = arith.constant 0 : index
    %c0_6 = arith.constant 0 : index
    %3 = vector.load %arg5[%c0_5, %c0_6] : memref<1x128xf32, #tpu.memory_space<vmem>>, vector<1x128xf32>
    %c0_7 = arith.constant 0 : index
    %c0_8 = arith.constant 0 : index
    %4 = vector.load %arg1[%c0_7, %c0_8] : memref<2x32xf32, #tpu.memory_space<vmem>>, vector<2x32xf32>
    %5 = arith.truncf %4 : vector<2x32xf32> to vector<2x32xbf16>
    %cst = arith.constant dense<0.000000e+00> : vector<2x128xf32>
    %6 = tpu.matmul %5, %0, %cst {dimension_numbers = #tpu.dot_dimension_numbers<[1], [0], [0], [1], [0, 0, 1, 1], [], []>} : vector<2x32xbf16>, vector<32x128xbf16>, vector<2x128xf32> -> vector<2x128xf32>
    %7 = vector.broadcast %2 : vector<1x128xf32> to vector<2x128xf32>
    %8 = arith.addf %6, %7 : vector<2x128xf32>
    %cst_9 = arith.constant 0.000000e+00 : f32
    %9 = vector.broadcast %cst_9 : f32 to vector<2x128xf32>
    %10 = arith.maximumf %8, %9 : vector<2x128xf32>
    %11 = arith.truncf %10 : vector<2x128xf32> to vector<2x128xbf16>
    %cst_10 = arith.constant dense<0.000000e+00> : vector<2x128xf32>
    %12 = tpu.matmul %11, %1, %cst_10 {dimension_numbers = #tpu.dot_dimension_numbers<[1], [0], [0], [1], [0, 0, 1, 1], [], []>} : vector<2x128xbf16>, vector<128x128xbf16>, vector<2x128xf32> -> vector<2x128xf32>
    %13 = vector.broadcast %3 : vector<1x128xf32> to vector<2x128xf32>
    %14 = arith.addf %12, %13 : vector<2x128xf32>
    %cst_11 = arith.constant 0.000000e+00 : f32
    %15 = vector.broadcast %cst_11 : f32 to vector<2x128xf32>
    %16 = arith.maximumf %14, %15 : vector<2x128xf32>
    %c0_12 = arith.constant 0 : index
    %c0_13 = arith.constant 0 : index
    %17 = vector.load %arg6[%c0_12, %c0_13] : memref<2x128xf32, #tpu.memory_space<vmem>>, vector<2x128xf32>
    tpu.vector_store %arg6[%c0_12, %c0_13], %16 {strides = array<i32>} : memref<2x128xf32, #tpu.memory_space<vmem>>, vector<2x128xf32>,
    return
  }
  func.func @transform_0(%arg0: i32) -> (i32, i32) {
    %c0_i32 = arith.constant 0 : i32
    %c0_i32_0 = arith.constant 0 : i32
    return %arg0, %c0_i32 : i32, i32
  }
  func.func @transform_1(%arg0: i32) -> (i32, i32) {
    %c0_i32 = arith.constant 0 : i32
    %c0_i32_0 = arith.constant 0 : i32
    %c0_i32_1 = arith.constant 0 : i32
    return %c0_i32, %c0_i32_0 : i32, i32
  }
  func.func @transform_2(%arg0: i32) -> (i32, i32) {
    %c0_i32 = arith.constant 0 : i32
    %c0_i32_0 = arith.constant 0 : i32
    %c0_i32_1 = arith.constant 0 : i32
    return %c0_i32, %c0_i32_0 : i32, i32
  }
  func.func @transform_3(%arg0: i32) -> (i32, i32) {
    %c0_i32 = arith.constant 0 : i32
    %c0_i32_0 = arith.constant 0 : i32
    %c0_i32_1 = arith.constant 0 : i32
    return %c0_i32, %c0_i32_0 : i32, i32
  }
  func.func @transform_4(%arg0: i32) -> (i32, i32) {
    %c0_i32 = arith.constant 0 : i32
    %c0_i32_0 = arith.constant 0 : i32
    %c0_i32_1 = arith.constant 0 : i32
    return %c0_i32, %c0_i32_0 : i32, i32
  }
  func.func @transform_5(%arg0: i32) -> (i32, i32) {
    %c0_i32 = arith.constant 0 : i32
    %c0_i32_0 = arith.constant 0 : i32
    return %arg0, %c0_i32 : i32, i32
  }
}

module attributes {stable_mosaic.version = 11 : i64} {
  func.func @_mlp_kernel(%arg0: i32, %arg1: memref<2x32xf32, #tpu.memory_space<vmem>>, %arg2: memref<32x128xbf16, #tpu.memory_space<vmem>>, %arg3: memref<1x128xf32, #tpu.memory_space<vmem>>, %arg4: memref<128x128xbf16, #tpu.memory_space<vmem>>, %arg5: memref<1x128xf32, #tpu.memory_space<vmem>>, %arg6: memref<2x128xf32, #tpu.memory_space<vmem>>) attributes {dimension_semantics = [#tpu.dimension_semantics<parallel>], iteration_bounds = array<i64: 1>, scalar_prefetch = 0 : i64, scratch_operands = 0 : i64, tpu.core_type = #tpu.core_type<tc>, window_params = [{transform_indices = @transform_0, window_bounds = array<i64: 2, 32>}, {pipeline_mode = #tpu.pipeline_mode<synchronous>, transform_indices = @transform_1, window_bounds = array<i64: 32, 128>}, {pipeline_mode = #tpu.pipeline_mode<synchronous>, transform_indices = @transform_2, window_bounds = array<i64: 1, 128>}, {pipeline_mode = #tpu.pipeline_mode<synchronous>, transform_indices = @transform_3, window_bounds = array<i64: 128, 128>}, {pipeline_mode = #tpu.pipeline_mode<synchronous>, transform_indices = @transform_4, window_bounds = array<i64: 1, 128>}, {transform_indices = @transform_5, window_bounds = array<i64: 2, 128>}]} {
    %c0 = arith.constant 0 : index
    %c0_0 = arith.constant 0 : index
    %0 = vector.load %arg2[%c0, %c0_0] : memref<32x128xbf16, #tpu.memory_space<vmem>>, vector<32x128xbf16>
    %c0_1 = arith.constant 0 : index
    %c0_2 = arith.constant 0 : index
    %1 = vector.load %arg4[%c0_1, %c0_2] : memref<128x128xbf16, #tpu.memory_space<vmem>>, vector<128x128xbf16>
    %c0_3 = arith.constant 0 : index
    %c0_4 = arith.constant 0 : index
    %2 = vector.load %arg3[%c0_3, %c0_4] : memref<1x128xf32, #tpu.memory_space<vmem>>, vector<1x128xf32>
    %c0_5 = arith.constant 0 : index
    %c0_6 = arith.constant 0 : index
    %3 = vector.load %arg5[%c0_5, %c0_6] : memref<1x128xf32, #tpu.memory_space<vmem>>, vector<1x128xf32>
    %c0_7 = arith.constant 0 : index
    %c0_8 = arith.constant 0 : index
    %4 = vector.load %arg1[%c0_7, %c0_8] : memref<2x32xf32, #tpu.memory_space<vmem>>, vector<2x32xf32>
    %5 = arith.truncf %4 : vector<2x32xf32> to vector<2x32xbf16>
    %cst = arith.constant dense<0.000000e+00> : vector<2x128xf32>
    %6 = tpu.matmul %5, %0, %cst {dimension_numbers = #tpu.dot_dimension_numbers<[1], [0], [0], [1], [0, 0, 1, 1], [], []>} : vector<2x32xbf16>, vector<32x128xbf16>, vector<2x128xf32> -> vector<2x128xf32>
    %7 = vector.broadcast %2 : vector<1x128xf32> to vector<2x128xf32>
    %8 = arith.addf %6, %7 : vector<2x128xf32>
    %cst_9 = arith.constant 0.000000e+00 : f32
    %9 = vector.broadcast %cst_9 : f32 to vector<2x128xf32>
    %10 = arith.maximumf %8, %9 : vector<2x128xf32>
    %11 = arith.truncf %10 : vector<2x128xf32> to vector<2x128xbf16>
    %cst_10 = arith.constant dense<0.000000e+00> : vector<2x128xf32>
    %12 = tpu.matmul %11, %1, %cst_10 {dimension_numbers = #tpu.dot_dimension_numbers<[1], [0], [0], [1], [0, 0, 1, 1], [], []>} : vector<2x128xbf16>, vector<128x128xbf16>, vector<2x128xf32> -> vector<2x128xf32>
    %13 = vector.broadcast %3 : vector<1x128xf32> to vector<2x128xf32>
    %14 = arith.addf %12, %13 : vector<2x128xf32>
    %cst_11 = arith.constant 0.000000e+00 : f32
    %15 = vector.broadcast %cst_11 : f32 to vector<2x128xf32>
    %16 = arith.maximumf %14, %15 : vector<2x128xf32>
    %c0_12 = arith.constant 0 : index
    %c0_13 = arith.constant 0 : index
    %17 = vector.load %arg6[%c0_12, %c0_13] : memref<2x128xf32, #tpu.memory_space<vmem>>, vector<2x128xf32>
    tpu.vector_store %arg6[%c0_12, %c0_13], %16 {strides = array<i32>} : memref<2x128xf32, #tpu.memory_space<vmem>>, vector<2x128xf32>,
    return
  }
  func.func @transform_0(%arg0: i32) -> (i32, i32) {
    %c0_i32 = arith.constant 0 : i32
    %c0_i32_0 = arith.constant 0 : i32
    return %arg0, %c0_i32 : i32, i32
  }
  func.func @transform_1(%arg0: i32) -> (i32, i32) {
    %c0_i32 = arith.constant 0 : i32
    %c0_i32_0 = arith.constant 0 : i32
    %c0_i32_1 = arith.constant 0 : i32
    return %c0_i32, %c0_i32_0 : i32, i32
  }
  func.func @transform_2(%arg0: i32) -> (i32, i32) {
    %c0_i32 = arith.constant 0 : i32
    %c0_i32_0 = arith.constant 0 : i32
    %c0_i32_1 = arith.constant 0 : i32
    return %c0_i32, %c0_i32_0 : i32, i32
  }
  func.func @transform_3(%arg0: i32) -> (i32, i32) {
    %c0_i32 = arith.constant 0 : i32
    %c0_i32_0 = arith.constant 0 : i32
    %c0_i32_1 = arith.constant 0 : i32
    return %c0_i32, %c0_i32_0 : i32, i32
  }
  func.func @transform_4(%arg0: i32) -> (i32, i32) {
    %c0_i32 = arith.constant 0 : i32
    %c0_i32_0 = arith.constant 0 : i32
    %c0_i32_1 = arith.constant 0 : i32
    return %c0_i32, %c0_i32_0 : i32, i32
  }
  func.func @transform_5(%arg0: i32) -> (i32, i32) {
    %c0_i32 = arith.constant 0 : i32
    %c0_i32_0 = arith.constant 0 : i32
    return %arg0, %c0_i32 : i32, i32
  }
}

</mosaic_0001>

<llo_original>
// kernel: tpu_custom_call.1
$region0: #{tpu_custom_call.1}
  #allocation0 [shape = 'u32[]', space=smem, size = 0x4, offset = 0x4, fixed_abs, tag = 'smem constant byte address 0x4 - core index']
  #allocation1 [shape = 'u32[144,128]{1,0:T(1,128)}', space=vmem, size = 0x12000, scoped, tag = 'internal scratch']
  %s0 = inlined_call_operand.hbm [shape: f32[2,32], index: 0, kind: input, shape index: {}]
  %s1 = inlined_call_operand.hbm [shape: bf16[32,128], index: 1, kind: input, shape index: {}]
  %s2 = inlined_call_operand.vmem [shape: f32[1,128], index: 2, kind: input, shape index: {}]
  %s3 = inlined_call_operand.hbm [shape: bf16[128,128], index: 3, kind: input, shape index: {}]
  %s4 = inlined_call_operand.vmem [shape: f32[1,128], index: 4, kind: input, shape index: {}]
  %s5 = inlined_call_operand.hbm [shape: f32[2,128], index: 5, kind: output, shape index: {}]
  %s6 = sld [smem:[#allocation0]]
  $region42: #{tpu_custom_call.1} parent=0
    _
  %s8 = ssub.s32 1, %s6
  %s9 = scalar_select 0, %s8, %s6
  $region1: #{tpu_custom_call.1} parent=0
    #allocation2 [shape = 'u8[1024]{0}', space=vmem, size = 0x400, scoped, tag = 'input window, operand 0, single buffered']
    #allocation3 [shape = 's32[1]{0}', space=sflag, size = 0x4, scoped, tag = 'scoped memory for tpu_custom_call.1']
    #allocation4 [shape = 's32[1]{0}', space=sflag, size = 0x4, scoped, tag = 'scoped memory for tpu_custom_call.1']
    #allocation5 [shape = 'u8[8192]{0}', space=vmem, size = 0x2000, scoped, tag = 'input window, operand 1, single buffered']
    #allocation6 [shape = 's32[1]{0}', space=sflag, size = 0x4, scoped, tag = 'scoped memory for tpu_custom_call.1']
    #allocation7 [shape = 'u8[32768]{0}', space=vmem, size = 0x8000, scoped, tag = 'input window, operand 3, single buffered']
    #allocation8 [shape = 'u8[1024]{0}', space=vmem, size = 0x400, scoped, tag = 'output window, operand 0, single buffered']
    %10 = vsyncpa [#allocation3], 0
    %11 = vsyncpa [#allocation6], 0
    %12 = vsyncpa [#allocation4], 0
    // Predicated region
    $region2: #{tpu_custom_call.1} parent=1 // pred_check
      _
    $region3: #{tpu_custom_call.1} parent=1 // pred_check_branch
      %14 = sbr.rel (0) target = $region5
    $region4: #{tpu_custom_call.1} parent=1 // pred_region
      %s16 = ssub.s32 32, 32
      %17 = vsyncadd [#allocation3], %s16
      %s19 = sshll.u32 [#allocation2], 4
      %s20 = int_to_ptr.vmem [resolvable:$true] %s19
      %22 = dma.hbm_to_vmem [thread:$0]  %s0, 32, %s20, [#allocation3]
    $region5: #{tpu_custom_call.1} parent=1 // pred_fallthru
      _
    // Predicated region
    $region6: #{tpu_custom_call.1} parent=1 // pred_check
      _
    $region7: #{tpu_custom_call.1} parent=1 // pred_check_branch
      %24 = sbr.rel (0) target = $region9
    $region8: #{tpu_custom_call.1} parent=1 // pred_region
      %s26 = ssub.s32 256, 256
      %27 = vsyncadd [#allocation6], %s26
      %s28 = sshll.u32 [#allocation5], 4
      %s29 = int_to_ptr.vmem [resolvable:$true] %s28
      %34 = dma.hbm_to_vmem [thread:$0]  %s1, 256, %s29, [#allocation6], 64, 64, 4
    $region9: #{tpu_custom_call.1} parent=1 // pred_fallthru
      _
    // Predicated region
    $region10: #{tpu_custom_call.1} parent=1 // pred_check
      _
    $region11: #{tpu_custom_call.1} parent=1 // pred_check_branch
      %36 = sbr.rel (0) target = $region13
    $region12: #{tpu_custom_call.1} parent=1 // pred_region
      _
    $region13: #{tpu_custom_call.1} parent=1 // pred_fallthru
      _
    // Predicated region
    $region14: #{tpu_custom_call.1} parent=1 // pred_check
      _
    $region15: #{tpu_custom_call.1} parent=1 // pred_check_branch
      %38 = sbr.rel (0) target = $region17
    $region16: #{tpu_custom_call.1} parent=1 // pred_region
      %s40 = ssub.s32 1024, 1024
      %41 = vsyncadd [#allocation6], %s40
      %s42 = sshll.u32 [#allocation7], 4
      %s43 = int_to_ptr.vmem [resolvable:$true] %s42
      %48 = dma.hbm_to_vmem [thread:$0]  %s3, 1024, %s43, [#allocation6], 64, 64, 4
    $region17: #{tpu_custom_call.1} parent=1 // pred_fallthru
      _
    // Predicated region
    $region18: #{tpu_custom_call.1} parent=1 // pred_check
      _
    $region19: #{tpu_custom_call.1} parent=1 // pred_check_branch
      %50 = sbr.rel (0) target = $region21
    $region20: #{tpu_custom_call.1} parent=1 // pred_region
      _
    $region21: #{tpu_custom_call.1} parent=1 // pred_fallthru
      _
    // Predicated region
    $region22: #{tpu_custom_call.1} parent=1 // pred_check
      _
    $region23: #{tpu_custom_call.1} parent=1 // pred_check_branch
      %52 = sbr.rel (0) target = $region25
    $region24: #{tpu_custom_call.1} parent=1 // pred_region
      %53 = dma.done [#allocation3], 32
    $region25: #{tpu_custom_call.1} parent=1 // pred_fallthru
      _
    // Predicated region
    $region26: #{tpu_custom_call.1} parent=1 // pred_check
      _
    $region27: #{tpu_custom_call.1} parent=1 // pred_check_branch
      %55 = sbr.rel (0) target = $region29
    $region28: #{tpu_custom_call.1} parent=1 // pred_region
      %56 = dma.done [#allocation6], 256
    $region29: #{tpu_custom_call.1} parent=1 // pred_fallthru
      _
    // Predicated region
    $region30: #{tpu_custom_call.1} parent=1 // pred_check
      _
    $region31: #{tpu_custom_call.1} parent=1 // pred_check_branch
      %58 = sbr.rel (0) target = $region33
    $region32: #{tpu_custom_call.1} parent=1 // pred_region
      %59 = dma.done [#allocation6], 1024
    $region33: #{tpu_custom_call.1} parent=1 // pred_fallthru
      _
    %v61 = vld [vmem:[#allocation5] sm:$0xf]
    %v62 = vld [vmem:[#allocation5 + $0x4] sm:$0xf]
    %v63 = vld [vmem:[#allocation5 + $0x8] sm:$0xf]
    %v64 = vld [vmem:[#allocation5 + $0xc] sm:$0xf]
    %v65 = vld [vmem:[#allocation7] sm:$0xf]
    %v66 = vld [vmem:[#allocation7 + $0x4] sm:$0xf]
    %v67 = vld [vmem:[#allocation7 + $0x8] sm:$0xf]
    %v68 = vld [vmem:[#allocation7 + $0xc] sm:$0xf]
    %v69 = vld [vmem:[#allocation7 + $0x10] sm:$0xf]
    %v70 = vld [vmem:[#allocation7 + $0x14] sm:$0xf]
    %v71 = vld [vmem:[#allocation7 + $0x18] sm:$0xf]
    %v72 = vld [vmem:[#allocation7 + $0x1c] sm:$0xf]
    %v73 = vld [vmem:[#allocation7 + $0x20] sm:$0xf]
    %v74 = vld [vmem:[#allocation7 + $0x24] sm:$0xf]
    %v75 = vld [vmem:[#allocation7 + $0x28] sm:$0xf]
    %v76 = vld [vmem:[#allocation7 + $0x2c] sm:$0xf]
    %v77 = vld [vmem:[#allocation7 + $0x30] sm:$0xf]
    %v78 = vld [vmem:[#allocation7 + $0x34] sm:$0xf]
    %v79 = vld [vmem:[#allocation7 + $0x38] sm:$0xf]
    %v80 = vld [vmem:[#allocation7 + $0x3c] sm:$0xf]
    %v81 = vld [vmem:[%s2] sm:$0x1]
    %v82 = vld [vmem:[%s4] sm:$0x1]
    %v83 = vld [vmem:[#allocation2] sm:$0x3]
    %v84 = vpack.c.bf16 %v83, %v83
    %v86 = vlaneseq
    %v87 = vshrl.u32 %v86, 7
    %v88 = vsub.s32 0, %v87
    %v89 = vrot.slane %v81, %v88
    %v95 = vunpack.c.l.b16 %v61
    %v96 = vunpack.c.l.b16 %v62
    %v97 = vunpack.c.l.b16 %v63
    %v98 = vunpack.c.l.b16 %v64
    %v99 = vpack.c.b16 %v96, %v95
    %v100 = vpack.c.b16 %v98, %v97
    %vm103 = vcmask 261120
    %v105 = vsel %vm103, %v84, 0
    %107 = vmatprep.subr.bf16.mxu0 0
    %108 = vmatpush1.bf16.msra.mxu0 0
    %109 = vmatprep.subr.bf16.mxu0 0
    %110 = vmatpush1.bf16.msra.mxu0 0
    %111 = vmatprep.subr.bf16.mxu0 0
    %112 = vmatpush1.bf16.msra.mxu0 0
    %113 = vmatprep.subr.bf16.mxu0 0
    %114 = vmatpush1.bf16.msra.mxu0 0
    %115 = vmatprep.subr.bf16.mxu0 0
    %116 = vmatpush1.bf16.msra.mxu0 0
    %117 = vmatprep.subr.bf16.mxu0 0
    %118 = vmatpush1.bf16.msra.mxu0 0
    %119 = vmatprep.subr.bf16.mxu0 0
    %120 = vmatpush1.bf16.msra.mxu0 %v100
    %121 = vmatprep.subr.bf16.mxu0 0
    %122 = vmatpush1.bf16.msra.mxu0 %v99
    %123 = vmatprep.subr.bf16.mxu0 0
    %124 = vmatpush2.bf16.msra.mxu0 0
    %125 = vmatprep.subr.bf16.mxu0 0
    %126 = vmatpush2.bf16.msra.mxu0 0
    %127 = vmatprep.subr.bf16.mxu0 0
    %128 = vmatpush2.bf16.msra.mxu0 0
    %129 = vmatprep.subr.bf16.mxu0 0
    %130 = vmatpush2.bf16.msra.mxu0 0
    %131 = vmatprep.subr.bf16.mxu0 0
    %132 = vmatpush2.bf16.msra.mxu0 0
    %133 = vmatprep.subr.bf16.mxu0 0
    %134 = vmatpush2.bf16.msra.mxu0 0
    %135 = vmatprep.subr.bf16.mxu0 0
    %136 = vmatpush2.bf16.msra.mxu0 0
    %137 = vmatprep.subr.bf16.mxu0 0
    %138 = vmatpush2.bf16.msra.mxu0 0
    %139 = vmatprep.mubr.bf16.mxu0 0
    %140 = vmatmul.mubr.bf16.gmra.mxu0 %v105
    %v141 = vpop.f32.mrf.mxu0
    %v142 = vadd.f32 %v89, %v141
    %v143 = vpop.f32.mrf.mxu0
    %v144 = vpop.f32.mrf.mxu0
    %v145 = vpop.f32.mrf.mxu0
    %146 = vdwg.mxu0
    %v147 = vmax.f32 %v142, 0.0
    %v148 = vpack.c.bf16 %v147, %v147
    %v150 = vlaneseq
    %v151 = vshrl.u32 %v150, 7
    %v152 = vsub.s32 0, %v151
    %v153 = vrot.slane %v82, %v152
    %v171 = vunpack.c.l.b16 %v65
    %v172 = vunpack.c.l.b16 %v66
    %v173 = vunpack.c.l.b16 %v67
    %v174 = vunpack.c.l.b16 %v68
    %v175 = vunpack.c.l.b16 %v69
    %v176 = vunpack.c.l.b16 %v70
    %v177 = vunpack.c.l.b16 %v71
    %v178 = vunpack.c.l.b16 %v72
    %v179 = vunpack.c.l.b16 %v73
    %v180 = vunpack.c.l.b16 %v74
    %v181 = vunpack.c.l.b16 %v75
    %v182 = vunpack.c.l.b16 %v76
    %v183 = vunpack.c.l.b16 %v77
    %v184 = vunpack.c.l.b16 %v78
    %v185 = vunpack.c.l.b16 %v79
    %v186 = vunpack.c.l.b16 %v80
    %v187 = vpack.c.b16 %v172, %v171
    %v188 = vpack.c.b16 %v174, %v173
    %v189 = vpack.c.b16 %v176, %v175
    %v190 = vpack.c.b16 %v178, %v177
    %v191 = vpack.c.b16 %v180, %v179
    %v192 = vpack.c.b16 %v182, %v181
    %v193 = vpack.c.b16 %v184, %v183
    %v194 = vpack.c.b16 %v186, %v185
    %203 = vmatprep.subr.bf16.mxu0 0
    %204 = vmatpush1.bf16.msra.mxu0 %v194
    %205 = vmatprep.subr.bf16.mxu0 0
    %206 = vmatpush1.bf16.msra.mxu0 %v193
    %207 = vmatprep.subr.bf16.mxu0 0
    %208 = vmatpush1.bf16.msra.mxu0 %v192
    %209 = vmatprep.subr.bf16.mxu0 0
    %210 = vmatpush1.bf16.msra.mxu0 %v191
    %211 = vmatprep.subr.bf16.mxu0 0
    %212 = vmatpush1.bf16.msra.mxu0 %v190
    %213 = vmatprep.subr.bf16.mxu0 0
    %214 = vmatpush1.bf16.msra.mxu0 %v189
    %215 = vmatprep.subr.bf16.mxu0 0
    %216 = vmatpush1.bf16.msra.mxu0 %v188
    %217 = vmatprep.subr.bf16.mxu0 0
    %218 = vmatpush1.bf16.msra.mxu0 %v187
    %219 = vmatprep.subr.bf16.mxu0 0
    %220 = vmatpush2.bf16.msra.mxu0 0
    %221 = vmatprep.subr.bf16.mxu0 0
    %222 = vmatpush2.bf16.msra.mxu0 0
    %223 = vmatprep.subr.bf16.mxu0 0
    %224 = vmatpush2.bf16.msra.mxu0 0
    %225 = vmatprep.subr.bf16.mxu0 0
    %226 = vmatpush2.bf16.msra.mxu0 0
    %227 = vmatprep.subr.bf16.mxu0 0
    %228 = vmatpush2.bf16.msra.mxu0 0
    %229 = vmatprep.subr.bf16.mxu0 0
    %230 = vmatpush2.bf16.msra.mxu0 0
    %231 = vmatprep.subr.bf16.mxu0 0
    %232 = vmatpush2.bf16.msra.mxu0 0
    %233 = vmatprep.subr.bf16.mxu0 0
    %234 = vmatpush2.bf16.msra.mxu0 0
    %235 = vmatprep.mubr.bf16.mxu0 0
    %236 = vmatmul.mubr.bf16.gmra.mxu0 %v148
    %v237 = vpop.f32.mrf.mxu0
    %v238 = vadd.f32 %v153, %v237
    %v239 = vpop.f32.mrf.mxu0
    %v240 = vpop.f32.mrf.mxu0
    %v241 = vpop.f32.mrf.mxu0
    %242 = vdwg.mxu0
    %v243 = vmax.f32 %v238, 0.0
    %244 = vst [vmem:[#allocation8] sm:$0x3] %v243
    // Predicated region
    $region34: #{tpu_custom_call.1} parent=1 // pred_check
      _
    $region35: #{tpu_custom_call.1} parent=1 // pred_check_branch
      %246 = sbr.rel (0) target = $region37
    $region36: #{tpu_custom_call.1} parent=1 // pred_region
      %s248 = ssub.s32 32, 32
      %249 = vsyncadd [#allocation4], %s248
      %s251 = sshll.u32 [#allocation8], 4
      %s252 = int_to_ptr.vmem [resolvable:$true] %s251
      %254 = dma.vmem_to_hbm [thread:$0]  %s252, 32, %s5, [#allocation4]
    $region37: #{tpu_custom_call.1} parent=1 // pred_fallthru
      _
    // Predicated region
    $region38: #{tpu_custom_call.1} parent=1 // pred_check
      _
    $region39: #{tpu_custom_call.1} parent=1 // pred_check_branch
      %256 = sbr.rel (0) target = $region41
    $region40: #{tpu_custom_call.1} parent=1 // pred_region
      %257 = dma.done [#allocation4], 32
    $region41: #{tpu_custom_call.1} parent=1 // pred_fallthru
      _
    %258 = vsyncpa [#allocation3], 1
    %259 = vsyncpa [#allocation6], 1
    %260 = vsyncpa [#allocation4], 1

// kernel: tpu_custom_call.1
$region0: #{tpu_custom_call.1}
  #allocation0 [shape = 'u32[]', space=smem, size = 0x4, offset = 0x4, fixed_abs, tag = 'smem constant byte address 0x4 - core index']
  #allocation1 [shape = 'u32[144,128]{1,0:T(1,128)}', space=vmem, size = 0x12000, scoped, tag = 'internal scratch']
  %s0 = inlined_call_operand.hbm [shape: f32[2,32], index: 0, kind: input, shape index: {}]
  %s1 = inlined_call_operand.hbm [shape: bf16[32,128], index: 1, kind: input, shape index: {}]
  %s2 = inlined_call_operand.vmem [shape: f32[1,128], index: 2, kind: input, shape index: {}]
  %s3 = inlined_call_operand.hbm [shape: bf16[128,128], index: 3, kind: input, shape index: {}]
  %s4 = inlined_call_operand.vmem [shape: f32[1,128], index: 4, kind: input, shape index: {}]
  %s5 = inlined_call_operand.hbm [shape: f32[2,128], index: 5, kind: output, shape index: {}]
  %s6 = sld [smem:[#allocation0]]
  $region42: #{tpu_custom_call.1} parent=0
    _
  %s8 = ssub.s32 1, %s6
  %s9 = scalar_select 0, %s8, %s6
  $region1: #{tpu_custom_call.1} parent=0
    #allocation2 [shape = 'u8[1024]{0}', space=vmem, size = 0x400, scoped, tag = 'input window, operand 0, single buffered']
    #allocation3 [shape = 's32[1]{0}', space=sflag, size = 0x4, scoped, tag = 'scoped memory for tpu_custom_call.1']
    #allocation4 [shape = 's32[1]{0}', space=sflag, size = 0x4, scoped, tag = 'scoped memory for tpu_custom_call.1']
    #allocation5 [shape = 'u8[8192]{0}', space=vmem, size = 0x2000, scoped, tag = 'input window, operand 1, single buffered']
    #allocation6 [shape = 's32[1]{0}', space=sflag, size = 0x4, scoped, tag = 'scoped memory for tpu_custom_call.1']
    #allocation7 [shape = 'u8[32768]{0}', space=vmem, size = 0x8000, scoped, tag = 'input window, operand 3, single buffered']
    #allocation8 [shape = 'u8[1024]{0}', space=vmem, size = 0x400, scoped, tag = 'output window, operand 0, single buffered']
    %10 = vsyncpa [#allocation3], 0
    %11 = vsyncpa [#allocation6], 0
    %12 = vsyncpa [#allocation4], 0
    // Predicated region
    $region2: #{tpu_custom_call.1} parent=1 // pred_check
      _
    $region3: #{tpu_custom_call.1} parent=1 // pred_check_branch
      %14 = sbr.rel (0) target = $region5
    $region4: #{tpu_custom_call.1} parent=1 // pred_region
      %s16 = ssub.s32 32, 32
      %17 = vsyncadd [#allocation3], %s16
      %s19 = sshll.u32 [#allocation2], 4
      %s20 = int_to_ptr.vmem [resolvable:$true] %s19
      %22 = dma.hbm_to_vmem [thread:$0]  %s0, 32, %s20, [#allocation3]
    $region5: #{tpu_custom_call.1} parent=1 // pred_fallthru
      _
    // Predicated region
    $region6: #{tpu_custom_call.1} parent=1 // pred_check
      _
    $region7: #{tpu_custom_call.1} parent=1 // pred_check_branch
      %24 = sbr.rel (0) target = $region9
    $region8: #{tpu_custom_call.1} parent=1 // pred_region
      %s26 = ssub.s32 256, 256
      %27 = vsyncadd [#allocation6], %s26
      %s28 = sshll.u32 [#allocation5], 4
      %s29 = int_to_ptr.vmem [resolvable:$true] %s28
      %34 = dma.hbm_to_vmem [thread:$0]  %s1, 256, %s29, [#allocation6], 64, 64, 4
    $region9: #{tpu_custom_call.1} parent=1 // pred_fallthru
      _
    // Predicated region
    $region10: #{tpu_custom_call.1} parent=1 // pred_check
      _
    $region11: #{tpu_custom_call.1} parent=1 // pred_check_branch
      %36 = sbr.rel (0) target = $region13
    $region12: #{tpu_custom_call.1} parent=1 // pred_region
      _
    $region13: #{tpu_custom_call.1} parent=1 // pred_fallthru
      _
    // Predicated region
    $region14: #{tpu_custom_call.1} parent=1 // pred_check
      _
    $region15: #{tpu_custom_call.1} parent=1 // pred_check_branch
      %38 = sbr.rel (0) target = $region17
    $region16: #{tpu_custom_call.1} parent=1 // pred_region
      %s40 = ssub.s32 1024, 1024
      %41 = vsyncadd [#allocation6], %s40
      %s42 = sshll.u32 [#allocation7], 4
      %s43 = int_to_ptr.vmem [resolvable:$true] %s42
      %48 = dma.hbm_to_vmem [thread:$0]  %s3, 1024, %s43, [#allocation6], 64, 64, 4
    $region17: #{tpu_custom_call.1} parent=1 // pred_fallthru
      _
    // Predicated region
    $region18: #{tpu_custom_call.1} parent=1 // pred_check
      _
    $region19: #{tpu_custom_call.1} parent=1 // pred_check_branch
      %50 = sbr.rel (0) target = $region21
    $region20: #{tpu_custom_call.1} parent=1 // pred_region
      _
    $region21: #{tpu_custom_call.1} parent=1 // pred_fallthru
      _
    // Predicated region
    $region22: #{tpu_custom_call.1} parent=1 // pred_check
      _
    $region23: #{tpu_custom_call.1} parent=1 // pred_check_branch
      %52 = sbr.rel (0) target = $region25
    $region24: #{tpu_custom_call.1} parent=1 // pred_region
      %53 = dma.done [#allocation3], 32
    $region25: #{tpu_custom_call.1} parent=1 // pred_fallthru
      _
    // Predicated region
    $region26: #{tpu_custom_call.1} parent=1 // pred_check
      _
    $region27: #{tpu_custom_call.1} parent=1 // pred_check_branch
      %55 = sbr.rel (0) target = $region29
    $region28: #{tpu_custom_call.1} parent=1 // pred_region
      %56 = dma.done [#allocation6], 256
    $region29: #{tpu_custom_call.1} parent=1 // pred_fallthru
      _
    // Predicated region
    $region30: #{tpu_custom_call.1} parent=1 // pred_check
      _
    $region31: #{tpu_custom_call.1} parent=1 // pred_check_branch
      %58 = sbr.rel (0) target = $region33
    $region32: #{tpu_custom_call.1} parent=1 // pred_region
      %59 = dma.done [#allocation6], 1024
    $region33: #{tpu_custom_call.1} parent=1 // pred_fallthru
      _
    %v61 = vld [vmem:[#allocation5] sm:$0xf]
    %v62 = vld [vmem:[#allocation5 + $0x4] sm:$0xf]
    %v63 = vld [vmem:[#allocation5 + $0x8] sm:$0xf]
    %v64 = vld [vmem:[#allocation5 + $0xc] sm:$0xf]
    %v65 = vld [vmem:[#allocation7] sm:$0xf]
    %v66 = vld [vmem:[#allocation7 + $0x4] sm:$0xf]
    %v67 = vld [vmem:[#allocation7 + $0x8] sm:$0xf]
    %v68 = vld [vmem:[#allocation7 + $0xc] sm:$0xf]
    %v69 = vld [vmem:[#allocation7 + $0x10] sm:$0xf]
    %v70 = vld [vmem:[#allocation7 + $0x14] sm:$0xf]
    %v71 = vld [vmem:[#allocation7 + $0x18] sm:$0xf]
    %v72 = vld [vmem:[#allocation7 + $0x1c] sm:$0xf]
    %v73 = vld [vmem:[#allocation7 + $0x20] sm:$0xf]
    %v74 = vld [vmem:[#allocation7 + $0x24] sm:$0xf]
    %v75 = vld [vmem:[#allocation7 + $0x28] sm:$0xf]
    %v76 = vld [vmem:[#allocation7 + $0x2c] sm:$0xf]
    %v77 = vld [vmem:[#allocation7 + $0x30] sm:$0xf]
    %v78 = vld [vmem:[#allocation7 + $0x34] sm:$0xf]
    %v79 = vld [vmem:[#allocation7 + $0x38] sm:$0xf]
    %v80 = vld [vmem:[#allocation7 + $0x3c] sm:$0xf]
    %v81 = vld [vmem:[%s2] sm:$0x1]
    %v82 = vld [vmem:[%s4] sm:$0x1]
    %v83 = vld [vmem:[#allocation2] sm:$0x3]
    %v84 = vpack.c.bf16 %v83, %v83
    %v86 = vlaneseq
    %v87 = vshrl.u32 %v86, 7
    %v88 = vsub.s32 0, %v87
    %v89 = vrot.slane %v81, %v88
    %v95 = vunpack.c.l.b16 %v61
    %v96 = vunpack.c.l.b16 %v62
    %v97 = vunpack.c.l.b16 %v63
    %v98 = vunpack.c.l.b16 %v64
    %v99 = vpack.c.b16 %v96, %v95
    %v100 = vpack.c.b16 %v98, %v97
    %vm103 = vcmask 261120
    %v105 = vsel %vm103, %v84, 0
    %107 = vmatprep.subr.bf16.mxu0 0
    %108 = vmatpush1.bf16.msra.mxu0 0
    %109 = vmatprep.subr.bf16.mxu0 0
    %110 = vmatpush1.bf16.msra.mxu0 0
    %111 = vmatprep.subr.bf16.mxu0 0
    %112 = vmatpush1.bf16.msra.mxu0 0
    %113 = vmatprep.subr.bf16.mxu0 0
    %114 = vmatpush1.bf16.msra.mxu0 0
    %115 = vmatprep.subr.bf16.mxu0 0
    %116 = vmatpush1.bf16.msra.mxu0 0
    %117 = vmatprep.subr.bf16.mxu0 0
    %118 = vmatpush1.bf16.msra.mxu0 0
    %119 = vmatprep.subr.bf16.mxu0 0
    %120 = vmatpush1.bf16.msra.mxu0 %v100
    %121 = vmatprep.subr.bf16.mxu0 0
    %122 = vmatpush1.bf16.msra.mxu0 %v99
    %123 = vmatprep.subr.bf16.mxu0 0
    %124 = vmatpush2.bf16.msra.mxu0 0
    %125 = vmatprep.subr.bf16.mxu0 0
    %126 = vmatpush2.bf16.msra.mxu0 0
    %127 = vmatprep.subr.bf16.mxu0 0
    %128 = vmatpush2.bf16.msra.mxu0 0
    %129 = vmatprep.subr.bf16.mxu0 0
    %130 = vmatpush2.bf16.msra.mxu0 0
    %131 = vmatprep.subr.bf16.mxu0 0
    %132 = vmatpush2.bf16.msra.mxu0 0
    %133 = vmatprep.subr.bf16.mxu0 0
    %134 = vmatpush2.bf16.msra.mxu0 0
    %135 = vmatprep.subr.bf16.mxu0 0
    %136 = vmatpush2.bf16.msra.mxu0 0
    %137 = vmatprep.subr.bf16.mxu0 0
    %138 = vmatpush2.bf16.msra.mxu0 0
    %139 = vmatprep.mubr.bf16.mxu0 0
    %140 = vmatmul.mubr.bf16.gmra.mxu0 %v105
    %v141 = vpop.f32.mrf.mxu0
    %v142 = vadd.f32 %v89, %v141
    %v143 = vpop.f32.mrf.mxu0
    %v144 = vpop.f32.mrf.mxu0
    %v145 = vpop.f32.mrf.mxu0
    %146 = vdwg.mxu0
    %v147 = vmax.f32 %v142, 0.0
    %v148 = vpack.c.bf16 %v147, %v147
    %v150 = vlaneseq
    %v151 = vshrl.u32 %v150, 7
    %v152 = vsub.s32 0, %v151
    %v153 = vrot.slane %v82, %v152
    %v171 = vunpack.c.l.b16 %v65
    %v172 = vunpack.c.l.b16 %v66
    %v173 = vunpack.c.l.b16 %v67
    %v174 = vunpack.c.l.b16 %v68
    %v175 = vunpack.c.l.b16 %v69
    %v176 = vunpack.c.l.b16 %v70
    %v177 = vunpack.c.l.b16 %v71
    %v178 = vunpack.c.l.b16 %v72
    %v179 = vunpack.c.l.b16 %v73
    %v180 = vunpack.c.l.b16 %v74
    %v181 = vunpack.c.l.b16 %v75
    %v182 = vunpack.c.l.b16 %v76
    %v183 = vunpack.c.l.b16 %v77
    %v184 = vunpack.c.l.b16 %v78
    %v185 = vunpack.c.l.b16 %v79
    %v186 = vunpack.c.l.b16 %v80
    %v187 = vpack.c.b16 %v172, %v171
    %v188 = vpack.c.b16 %v174, %v173
    %v189 = vpack.c.b16 %v176, %v175
    %v190 = vpack.c.b16 %v178, %v177
    %v191 = vpack.c.b16 %v180, %v179
    %v192 = vpack.c.b16 %v182, %v181
    %v193 = vpack.c.b16 %v184, %v183
    %v194 = vpack.c.b16 %v186, %v185
    %203 = vmatprep.subr.bf16.mxu0 0
    %204 = vmatpush1.bf16.msra.mxu0 %v194
    %205 = vmatprep.subr.bf16.mxu0 0
    %206 = vmatpush1.bf16.msra.mxu0 %v193
    %207 = vmatprep.subr.bf16.mxu0 0
    %208 = vmatpush1.bf16.msra.mxu0 %v192
    %209 = vmatprep.subr.bf16.mxu0 0
    %210 = vmatpush1.bf16.msra.mxu0 %v191
    %211 = vmatprep.subr.bf16.mxu0 0
    %212 = vmatpush1.bf16.msra.mxu0 %v190
    %213 = vmatprep.subr.bf16.mxu0 0
    %214 = vmatpush1.bf16.msra.mxu0 %v189
    %215 = vmatprep.subr.bf16.mxu0 0
    %216 = vmatpush1.bf16.msra.mxu0 %v188
    %217 = vmatprep.subr.bf16.mxu0 0
    %218 = vmatpush1.bf16.msra.mxu0 %v187
    %219 = vmatprep.subr.bf16.mxu0 0
    %220 = vmatpush2.bf16.msra.mxu0 0
    %221 = vmatprep.subr.bf16.mxu0 0
    %222 = vmatpush2.bf16.msra.mxu0 0
    %223 = vmatprep.subr.bf16.mxu0 0
    %224 = vmatpush2.bf16.msra.mxu0 0
    %225 = vmatprep.subr.bf16.mxu0 0
    %226 = vmatpush2.bf16.msra.mxu0 0
    %227 = vmatprep.subr.bf16.mxu0 0
    %228 = vmatpush2.bf16.msra.mxu0 0
    %229 = vmatprep.subr.bf16.mxu0 0
    %230 = vmatpush2.bf16.msra.mxu0 0
    %231 = vmatprep.subr.bf16.mxu0 0
    %232 = vmatpush2.bf16.msra.mxu0 0
    %233 = vmatprep.subr.bf16.mxu0 0
    %234 = vmatpush2.bf16.msra.mxu0 0
    %235 = vmatprep.mubr.bf16.mxu0 0
    %236 = vmatmul.mubr.bf16.gmra.mxu0 %v148
    %v237 = vpop.f32.mrf.mxu0
    %v238 = vadd.f32 %v153, %v237
    %v239 = vpop.f32.mrf.mxu0
    %v240 = vpop.f32.mrf.mxu0
    %v241 = vpop.f32.mrf.mxu0
    %242 = vdwg.mxu0
    %v243 = vmax.f32 %v238, 0.0
    %244 = vst [vmem:[#allocation8] sm:$0x3] %v243
    // Predicated region
    $region34: #{tpu_custom_call.1} parent=1 // pred_check
      _
    $region35: #{tpu_custom_call.1} parent=1 // pred_check_branch
      %246 = sbr.rel (0) target = $region37
    $region36: #{tpu_custom_call.1} parent=1 // pred_region
      %s248 = ssub.s32 32, 32
      %249 = vsyncadd [#allocation4], %s248
      %s251 = sshll.u32 [#allocation8], 4
      %s252 = int_to_ptr.vmem [resolvable:$true] %s251
      %254 = dma.vmem_to_hbm [thread:$0]  %s252, 32, %s5, [#allocation4]
    $region37: #{tpu_custom_call.1} parent=1 // pred_fallthru
      _
    // Predicated region
    $region38: #{tpu_custom_call.1} parent=1 // pred_check
      _
    $region39: #{tpu_custom_call.1} parent=1 // pred_check_branch
      %256 = sbr.rel (0) target = $region41
    $region40: #{tpu_custom_call.1} parent=1 // pred_region
      %257 = dma.done [#allocation4], 32
    $region41: #{tpu_custom_call.1} parent=1 // pred_fallthru
      _
    %258 = vsyncpa [#allocation3], 1
    %259 = vsyncpa [#allocation6], 1
    %260 = vsyncpa [#allocation4], 1

</llo_original>
